<compile_context>
chip_gen: v5e
topology: v5e:2x2
jax: 0.10.0
libtpu: 0.0.40
codegen_flags: <defaults>
</compile_context>

<pallas_src>
import numpy as np
import jax
import jax.numpy as jnp
from jax.experimental import pallas as pl
from jax.experimental.pallas import tpu as pltpu

_P = 2            # each cascaded stage is a 5x5 "same" pool (pad 2 per side)
_STAGES = 3       # 5x5, 9x9 (=5o5), 13x13 (=5o5o5)
_LEVELS = _STAGES + 1


def _vmem_budget_and_limit():
    """(tile-selection budget, vmem_limit_bytes) derived from the actual part."""
    try:
        cap = int(pltpu.get_tpu_info().vmem_capacity_bytes)
    except Exception:
        cap = 64 * 1024 * 1024           # conservative (v7x-sized) fallback
    budget = (cap * 3) // 5              # ~38 MiB on v7x, ~77 MiB on v5e/v6e
    limit = (cap * 3) // 4               # scoped limit, headroom below physical
    return budget, limit


def _step_footprint_bytes(tc, h, w, itemsize):
    tile = tc * h * w * itemsize
    pad = tc * (h + 2 * _P) * (w + 2 * _P) * itemsize   # -inf bordered stage input
    mid = tc * h * (w + 2 * _P) * itemsize              # H-pass intermediate
    # 2x double-buffered input + 2x double-buffered 4-level output
    # + 2 scratches + ~3 live temporaries (running maxima / store staging).
    return 2 * tile + 2 * _LEVELS * tile + pad + mid + 3 * tile


def _choose_channel_tile(n, c, h, w, itemsize, budget_bytes):
    divisors = [d for d in range(1, c + 1) if c % d == 0]
    fitting = [d for d in divisors
               if _step_footprint_bytes(d, h, w, itemsize) <= budget_bytes]
    if not fitting:
        # TODO(synk): add H tiling with a 6-row halo (2 rows per cascaded 5x5
        # stage, intermediates recomputed inside the halo) for feature maps so
        # large that even a single channel's slab exceeds the VMEM budget.
        raise ValueError(
            f"spp_layer: no channel tile fits the VMEM budget "
            f"({budget_bytes} B) for H={h}, W={w}; H tiling required.")
    tc = max(fitting)
    # Prefer enough grid steps to hide the 4-level writeback and feed both
    # v7x TensorCores, while keeping blocks big enough to amortize the
    # ~0.35 us per-step overhead.
    min_steps, min_tile_bytes = 8, 512 * 1024
    while n * (c // tc) < min_steps:
        smaller = [d for d in fitting
                   if d < tc and d * h * w * itemsize >= min_tile_bytes]
        if not smaller:
            break
        tc = max(smaller)
    return tc


def _spp_kernel(x_ref, o_ref, pad_ref, mid_ref):
    """One (batch, channel-tile) grid step.

    x_ref  : (1, tc, h, w)        input tile (NCHW; W on lanes, H on sublanes)
    o_ref  : (1, 4, tc, h, w)     pyramid level on axis 1
    pad_ref: (tc, h+4, w+4)       -inf bordered stage input (reused 3x)
    mid_ref: (tc, h,   w+4)       H-pass intermediate (inherits -inf W border)
    """
    _, tc, h, w = x_ref.shape
    hp, wp = h + 2 * _P, w + 2 * _P
    dt = pad_ref.dtype

    x = x_ref[0]                   # (tc, h, w), kept in the input dtype
    o_ref[0, 0] = x                # level 0: identity

    # -inf border, rewritten every grid step (cheap strips; the interior store
    # never touches it, and we do not rely on scratch persistence across a
    # megacore-partitioned "parallel" grid).
    pad_ref[:, 0:_P, :] = jnp.full((tc, _P, wp), -jnp.inf, dt)
    pad_ref[:, hp - _P:hp, :] = jnp.full((tc, _P, wp), -jnp.inf, dt)
    pad_ref[:, :, 0:_P] = jnp.full((tc, hp, _P), -jnp.inf, dt)
    pad_ref[:, :, wp - _P:wp] = jnp.full((tc, hp, _P), -jnp.inf, dt)

    # Cascade: pool5(x) = 5x5, pool5^2(x) = 9x9, pool5^3(x) = 13x13.
    # Each stage is separable; boundaries handled entirely by the -inf border
    # (no per-shift iota/where masking anywhere).
    cur = x
    for lvl in range(1, _STAGES + 1):
        pad_ref[:, _P:_P + h, _P:_P + w] = cur
        # H pass (sublane axis): 5 ref-sliced shifted reads, running max.
        # The -inf W-border columns survive the max, so mid_ref needs no
        # separate border initialization.
        t = pad_ref[:, 0:h, :]
        for dh in range(1, 2 * _P + 1):
            t = jnp.maximum(t, pad_ref[:, dh:dh + h, :])
        mid_ref[...] = t           # full-width, lane-offset-0 (aligned) store
        # W pass (lane axis): 5 ref-sliced shifted reads of the staged result.
        # TODO(synk): on v7x consider pltpu.roll-based shifts (idle XLU) to cut
        # vld pressure once HBM traffic is already minimal.
        r = mid_ref[:, :, 0:w]
        for dw in range(1, 2 * _P + 1):
            r = jnp.maximum(r, mid_ref[:, :, dw:dw + w])
        o_ref[0, lvl] = r          # each level stored as soon as it exists
        cur = r


@jax.jit
def spp_layer(x):
    """NCHW in -> NCHW out (N, 4*C, H, W); matches SPPLayer.forward."""
    if jnp.dtype(x.dtype) not in (jnp.dtype(jnp.float32),
                                  jnp.dtype(jnp.bfloat16),
                                  jnp.dtype(jnp.float16)):
        raise TypeError("spp_layer: supports float32/bfloat16/float16 only "
                        "(-inf max-pool border padding).")
    n, c, h, w = x.shape
    itemsize = jnp.dtype(x.dtype).itemsize
    budget, vmem_limit = _vmem_budget_and_limit()
    tc = _choose_channel_tile(n, c, h, w, itemsize, budget)

    out = pl.pallas_call(
        _spp_kernel,
        out_shape=jax.ShapeDtypeStruct((n, _LEVELS, c, h, w), x.dtype),
        grid=(n, c // tc),
        in_specs=[pl.BlockSpec((1, tc, h, w), lambda i, j: (i, j, 0, 0))],
        out_specs=pl.BlockSpec((1, _LEVELS, tc, h, w),
                               lambda i, j: (i, 0, j, 0, 0)),
        scratch_shapes=[
            pltpu.VMEM((tc, h + 2 * _P, w + 2 * _P), x.dtype),
            pltpu.VMEM((tc, h, w + 2 * _P), x.dtype),
        ],
        compiler_params=pltpu.CompilerParams(
            dimension_semantics=("parallel", "parallel"),
            vmem_limit_bytes=vmem_limit),
        cost_estimate=pl.CostEstimate(
            flops=8 * _STAGES * n * c * h * w,          # 24 max ops / element
            transcendentals=0,
            bytes_accessed=(1 + _LEVELS) * n * c * h * w * itemsize),
    )(x)                                                # (N, 4, C, H, W)

    # (N, 4, C, H, W) -> (N, 4C, H, W) is a pure view (adjacent dims merged):
    # channel order is [x, pool5, pool9, pool13], exactly torch.cat(dim=1).
    return out.reshape(n, _LEVELS * c, h, w)


def _reference_spp(x):
    def pool(v, k, pad):
        return jax.lax.reduce_window(
            v, -jnp.inf, jax.lax.max,
            window_dimensions=(1, 1, k, k),
            window_strides=(1, 1, 1, 1),
            padding=((0, 0), (0, 0), (pad, pad), (pad, pad)))
    return jnp.concatenate(
        [x, pool(x, 5, 2), pool(x, 9, 4), pool(x, 13, 6)], axis=1)


if __name__ == "__main__":
    key = jax.random.PRNGKey(0)
    x = jax.random.normal(key, (2, 4, 16, 16), dtype=jnp.float32)

    out = jax.block_until_ready(spp_layer(x))

    assert out.shape == (2, 16, 16, 16), out.shape
    ref = _reference_spp(x)
    np.testing.assert_allclose(np.asarray(out), np.asarray(ref), rtol=0, atol=0)

    print("KERNEL_OK")
</pallas_src>

<mosaic_0001>
module attributes {stable_mosaic.version = 11 : i64} {
  func.func @_spp_kernel(%arg0: i32, %arg1: i32, %arg2: memref<1x4x16x16xf32, #tpu.memory_space<vmem>>, %arg3: memref<1x4x4x16x16xf32, #tpu.memory_space<vmem>>, %arg4: memref<4x20x20xf32, #tpu.memory_space<vmem>>, %arg5: memref<4x16x20xf32, #tpu.memory_space<vmem>>) attributes {dimension_semantics = [#tpu.dimension_semantics<parallel>, #tpu.dimension_semantics<parallel>], iteration_bounds = array<i64: 2, 1>, scalar_prefetch = 0 : i64, scratch_operands = 2 : i64, tpu.core_type = #tpu.core_type<tc>, window_params = [{transform_indices = @transform_0, window_bounds = array<i64: 1, 4, 16, 16>}, {transform_indices = @transform_1, window_bounds = array<i64: 1, 4, 4, 16, 16>}]} {
    %c0 = arith.constant 0 : index
    %c0_0 = arith.constant 0 : index
    %c0_1 = arith.constant 0 : index
    %c0_2 = arith.constant 0 : index
    %0 = vector.load %arg2[%c0, %c0_0, %c0_1, %c0_2] : memref<1x4x16x16xf32, #tpu.memory_space<vmem>>, vector<1x4x16x16xf32>
    %1 = vector.shape_cast %0 : vector<1x4x16x16xf32> to vector<4x16x16xf32>
    %c0_3 = arith.constant 0 : index
    %c0_4 = arith.constant 0 : index
    %c0_5 = arith.constant 0 : index
    %c0_6 = arith.constant 0 : index
    %c0_7 = arith.constant 0 : index
    %2 = vector.load %arg3[%c0_3, %c0_4, %c0_5, %c0_6, %c0_7] : memref<1x4x4x16x16xf32, #tpu.memory_space<vmem>>, vector<1x1x4x16x16xf32>
    %3 = vector.shape_cast %2 : vector<1x1x4x16x16xf32> to vector<4x16x16xf32>
    %4 = vector.shape_cast %1 : vector<4x16x16xf32> to vector<1x1x4x16x16xf32>
    tpu.vector_store %arg3[%c0_3, %c0_4, %c0_5, %c0_6, %c0_7], %4 {strides = array<i32>} : memref<1x4x4x16x16xf32, #tpu.memory_space<vmem>>, vector<1x1x4x16x16xf32>,
    %cst = arith.constant 0xFF800000 : f32
    %5 = vector.broadcast %cst : f32 to vector<4x2x20xf32>
    %c0_8 = arith.constant 0 : index
    %c0_9 = arith.constant 0 : index
    %c0_10 = arith.constant 0 : index
    %6 = vector.load %arg4[%c0_8, %c0_9, %c0_10] : memref<4x20x20xf32, #tpu.memory_space<vmem>>, vector<4x2x20xf32>
    tpu.vector_store %arg4[%c0_8, %c0_9, %c0_10], %5 {strides = array<i32>} : memref<4x20x20xf32, #tpu.memory_space<vmem>>, vector<4x2x20xf32>,
    %cst_11 = arith.constant 0xFF800000 : f32
    %7 = vector.broadcast %cst_11 : f32 to vector<4x2x20xf32>
    %c0_12 = arith.constant 0 : index
    %c18 = arith.constant 18 : index
    %c0_13 = arith.constant 0 : index
    %8 = vector.load %arg4[%c0_12, %c18, %c0_13] : memref<4x20x20xf32, #tpu.memory_space<vmem>>, vector<4x2x20xf32>
    tpu.vector_store %arg4[%c0_12, %c18, %c0_13], %7 {strides = array<i32>} : memref<4x20x20xf32, #tpu.memory_space<vmem>>, vector<4x2x20xf32>,
    %cst_14 = arith.constant 0xFF800000 : f32
    %9 = vector.broadcast %cst_14 : f32 to vector<4x20x2xf32>
    %c0_15 = arith.constant 0 : index
    %c0_16 = arith.constant 0 : index
    %c0_17 = arith.constant 0 : index
    %10 = vector.load %arg4[%c0_15, %c0_16, %c0_17] : memref<4x20x20xf32, #tpu.memory_space<vmem>>, vector<4x20x2xf32>
    tpu.vector_store %arg4[%c0_15, %c0_16, %c0_17], %9 {strides = array<i32>} : memref<4x20x20xf32, #tpu.memory_space<vmem>>, vector<4x20x2xf32>,
    %cst_18 = arith.constant 0xFF800000 : f32
    %11 = vector.broadcast %cst_18 : f32 to vector<4x20x2xf32>
    %c0_19 = arith.constant 0 : index
    %c0_20 = arith.constant 0 : index
    %c18_21 = arith.constant 18 : index
    %12 = vector.load %arg4[%c0_19, %c0_20, %c18_21] : memref<4x20x20xf32, #tpu.memory_space<vmem>>, vector<4x20x2xf32>
    tpu.vector_store %arg4[%c0_19, %c0_20, %c18_21], %11 {strides = array<i32>} : memref<4x20x20xf32, #tpu.memory_space<vmem>>, vector<4x20x2xf32>,
    %c0_22 = arith.constant 0 : index
    %c2 = arith.constant 2 : index
    %c2_23 = arith.constant 2 : index
    %13 = vector.load %arg4[%c0_22, %c2, %c2_23] : memref<4x20x20xf32, #tpu.memory_space<vmem>>, vector<4x16x16xf32>
    tpu.vector_store %arg4[%c0_22, %c2, %c2_23], %1 {strides = array<i32>} : memref<4x20x20xf32, #tpu.memory_space<vmem>>, vector<4x16x16xf32>,
    %c0_24 = arith.constant 0 : index
    %c0_25 = arith.constant 0 : index
    %c0_26 = arith.constant 0 : index
    %14 = vector.load %arg4[%c0_24, %c0_25, %c0_26] : memref<4x20x20xf32, #tpu.memory_space<vmem>>, vector<4x16x20xf32>
    %c0_27 = arith.constant 0 : index
    %c1 = arith.constant 1 : index
    %c0_28 = arith.constant 0 : index
    %15 = vector.load %arg4[%c0_27, %c1, %c0_28] : memref<4x20x20xf32, #tpu.memory_space<vmem>>, vector<4x16x20xf32>
    %16 = arith.maximumf %14, %15 : vector<4x16x20xf32>
    %c0_29 = arith.constant 0 : index
    %c2_30 = arith.constant 2 : index
    %c0_31 = arith.constant 0 : index
    %17 = vector.load %arg4[%c0_29, %c2_30, %c0_31] : memref<4x20x20xf32, #tpu.memory_space<vmem>>, vector<4x16x20xf32>
    %18 = arith.maximumf %16, %17 : vector<4x16x20xf32>
    %c0_32 = arith.constant 0 : index
    %c3 = arith.constant 3 : index
    %c0_33 = arith.constant 0 : index
    %19 = vector.load %arg4[%c0_32, %c3, %c0_33] : memref<4x20x20xf32, #tpu.memory_space<vmem>>, vector<4x16x20xf32>
    %20 = arith.maximumf %18, %19 : vector<4x16x20xf32>
    %c0_34 = arith.constant 0 : index
    %c4 = arith.constant 4 : index
    %c0_35 = arith.constant 0 : index
    %21 = vector.load %arg4[%c0_34, %c4, %c0_35] : memref<4x20x20xf32, #tpu.memory_space<vmem>>, vector<4x16x20xf32>
    %22 = arith.maximumf %20, %21 : vector<4x16x20xf32>
    %c0_36 = arith.constant 0 : index
    %c0_37 = arith.constant 0 : index
    %c0_38 = arith.constant 0 : index
    %23 = vector.load %arg5[%c0_36, %c0_37, %c0_38] : memref<4x16x20xf32, #tpu.memory_space<vmem>>, vector<4x16x20xf32>
    tpu.vector_store %arg5[%c0_36, %c0_37, %c0_38], %22 {strides = array<i32>} : memref<4x16x20xf32, #tpu.memory_space<vmem>>, vector<4x16x20xf32>,
    %c0_39 = arith.constant 0 : index
    %c0_40 = arith.constant 0 : index
    %c0_41 = arith.constant 0 : index
    %24 = vector.load %arg5[%c0_39, %c0_40, %c0_41] : memref<4x16x20xf32, #tpu.memory_space<vmem>>, vector<4x16x16xf32>
    %c0_42 = arith.constant 0 : index
    %c0_43 = arith.constant 0 : index
    %c1_44 = arith.constant 1 : index
    %25 = vector.load %arg5[%c0_42, %c0_43, %c1_44] : memref<4x16x20xf32, #tpu.memory_space<vmem>>, vector<4x16x16xf32>
    %26 = arith.maximumf %24, %25 : vector<4x16x16xf32>
    %c0_45 = arith.constant 0 : index
    %c0_46 = arith.constant 0 : index
    %c2_47 = arith.constant 2 : index
    %27 = vector.load %arg5[%c0_45, %c0_46, %c2_47] : memref<4x16x20xf32, #tpu.memory_space<vmem>>, vector<4x16x16xf32>
    %28 = arith.maximumf %26, %27 : vector<4x16x16xf32>
    %c0_48 = arith.constant 0 : index
    %c0_49 = arith.constant 0 : index
    %c3_50 = arith.constant 3 : index
    %29 = vector.load %arg5[%c0_48, %c0_49, %c3_50] : memref<4x16x20xf32, #tpu.memory_space<vmem>>, vector<4x16x16xf32>
    %30 = arith.maximumf %28, %29 : vector<4x16x16xf32>
    %c0_51 = arith.constant 0 : index
    %c0_52 = arith.constant 0 : index
    %c4_53 = arith.constant 4 : index
    %31 = vector.load %arg5[%c0_51, %c0_52, %c4_53] : memref<4x16x20xf32, #tpu.memory_space<vmem>>, vector<4x16x16xf32>
    %32 = arith.maximumf %30, %31 : vector<4x16x16xf32>
    %c0_54 = arith.constant 0 : index
    %c1_55 = arith.constant 1 : index
    %c0_56 = arith.constant 0 : index
    %c0_57 = arith.constant 0 : index
    %c0_58 = arith.constant 0 : index
    %33 = vector.load %arg3[%c0_54, %c1_55, %c0_56, %c0_57, %c0_58] : memref<1x4x4x16x16xf32, #tpu.memory_space<vmem>>, vector<1x1x4x16x16xf32>
    %34 = vector.shape_cast %33 : vector<1x1x4x16x16xf32> to vector<4x16x16xf32>
    %35 = vector.shape_cast %32 : vector<4x16x16xf32> to vector<1x1x4x16x16xf32>
    tpu.vector_store %arg3[%c0_54, %c1_55, %c0_56, %c0_57, %c0_58], %35 {strides = array<i32>} : memref<1x4x4x16x16xf32, #tpu.memory_space<vmem>>, vector<1x1x4x16x16xf32>,
    %c0_59 = arith.constant 0 : index
    %c2_60 = arith.constant 2 : index
    %c2_61 = arith.constant 2 : index
    %36 = vector.load %arg4[%c0_59, %c2_60, %c2_61] : memref<4x20x20xf32, #tpu.memory_space<vmem>>, vector<4x16x16xf32>
    tpu.vector_store %arg4[%c0_59, %c2_60, %c2_61], %32 {strides = array<i32>} : memref<4x20x20xf32, #tpu.memory_space<vmem>>, vector<4x16x16xf32>,
    %c0_62 = arith.constant 0 : index
    %c0_63 = arith.constant 0 : index
    %c0_64 = arith.constant 0 : index
    %37 = vector.load %arg4[%c0_62, %c0_63, %c0_64] : memref<4x20x20xf32, #tpu.memory_space<vmem>>, vector<4x16x20xf32>
    %c0_65 = arith.constant 0 : index
    %c1_66 = arith.constant 1 : index
    %c0_67 = arith.constant 0 : index
    %38 = vector.load %arg4[%c0_65, %c1_66, %c0_67] : memref<4x20x20xf32, #tpu.memory_space<vmem>>, vector<4x16x20xf32>
    %39 = arith.maximumf %37, %38 : vector<4x16x20xf32>
    %c0_68 = arith.constant 0 : index
    %c2_69 = arith.constant 2 : index
    %c0_70 = arith.constant 0 : index
    %40 = vector.load %arg4[%c0_68, %c2_69, %c0_70] : memref<4x20x20xf32, #tpu.memory_space<vmem>>, vector<4x16x20xf32>
    %41 = arith.maximumf %39, %40 : vector<4x16x20xf32>
    %c0_71 = arith.constant 0 : index
    %c3_72 = arith.constant 3 : index
    %c0_73 = arith.constant 0 : index
    %42 = vector.load %arg4[%c0_71, %c3_72, %c0_73] : memref<4x20x20xf32, #tpu.memory_space<vmem>>, vector<4x16x20xf32>
    %43 = arith.maximumf %41, %42 : vector<4x16x20xf32>
    %c0_74 = arith.constant 0 : index
    %c4_75 = arith.constant 4 : index
    %c0_76 = arith.constant 0 : index
    %44 = vector.load %arg4[%c0_74, %c4_75, %c0_76] : memref<4x20x20xf32, #tpu.memory_space<vmem>>, vector<4x16x20xf32>
    %45 = arith.maximumf %43, %44 : vector<4x16x20xf32>
    %c0_77 = arith.constant 0 : index
    %c0_78 = arith.constant 0 : index
    %c0_79 = arith.constant 0 : index
    %46 = vector.load %arg5[%c0_77, %c0_78, %c0_79] : memref<4x16x20xf32, #tpu.memory_space<vmem>>, vector<4x16x20xf32>
    tpu.vector_store %arg5[%c0_77, %c0_78, %c0_79], %45 {strides = array<i32>} : memref<4x16x20xf32, #tpu.memory_space<vmem>>, vector<4x16x20xf32>,
    %c0_80 = arith.constant 0 : index
    %c0_81 = arith.constant 0 : index
    %c0_82 = arith.constant 0 : index
    %47 = vector.load %arg5[%c0_80, %c0_81, %c0_82] : memref<4x16x20xf32, #tpu.memory_space<vmem>>, vector<4x16x16xf32>
    %c0_83 = arith.constant 0 : index
    %c0_84 = arith.constant 0 : index
    %c1_85 = arith.constant 1 : index
    %48 = vector.load %arg5[%c0_83, %c0_84, %c1_85] : memref<4x16x20xf32, #tpu.memory_space<vmem>>, vector<4x16x16xf32>
    %49 = arith.maximumf %47, %48 : vector<4x16x16xf32>
    %c0_86 = arith.constant 0 : index
    %c0_87 = arith.constant 0 : index
    %c2_88 = arith.constant 2 : index
    %50 = vector.load %arg5[%c0_86, %c0_87, %c2_88] : memref<4x16x20xf32, #tpu.memory_space<vmem>>, vector<4x16x16xf32>
    %51 = arith.maximumf %49, %50 : vector<4x16x16xf32>
    %c0_89 = arith.constant 0 : index
    %c0_90 = arith.constant 0 : index
    %c3_91 = arith.constant 3 : index
    %52 = vector.load %arg5[%c0_89, %c0_90, %c3_91] : memref<4x16x20xf32, #tpu.memory_space<vmem>>, vector<4x16x16xf32>
    %53 = arith.maximumf %51, %52 : vector<4x16x16xf32>
    %c0_92 = arith.constant 0 : index
    %c0_93 = arith.constant 0 : index
    %c4_94 = arith.constant 4 : index
    %54 = vector.load %arg5[%c0_92, %c0_93, %c4_94] : memref<4x16x20xf32, #tpu.memory_space<vmem>>, vector<4x16x16xf32>
    %55 = arith.maximumf %53, %54 : vector<4x16x16xf32>
    %c0_95 = arith.constant 0 : index
    %c2_96 = arith.constant 2 : index
    %c0_97 = arith.constant 0 : index
    %c0_98 = arith.constant 0 : index
    %c0_99 = arith.constant 0 : index
    %56 = vector.load %arg3[%c0_95, %c2_96, %c0_97, %c0_98, %c0_99] : memref<1x4x4x16x16xf32, #tpu.memory_space<vmem>>, vector<1x1x4x16x16xf32>
    %57 = vector.shape_cast %56 : vector<1x1x4x16x16xf32> to vector<4x16x16xf32>
    %58 = vector.shape_cast %55 : vector<4x16x16xf32> to vector<1x1x4x16x16xf32>
    tpu.vector_store %arg3[%c0_95, %c2_96, %c0_97, %c0_98, %c0_99], %58 {strides = array<i32>} : memref<1x4x4x16x16xf32, #tpu.memory_space<vmem>>, vector<1x1x4x16x16xf32>,
    %c0_100 = arith.constant 0 : index
    %c2_101 = arith.constant 2 : index
    %c2_102 = arith.constant 2 : index
    %59 = vector.load %arg4[%c0_100, %c2_101, %c2_102] : memref<4x20x20xf32, #tpu.memory_space<vmem>>, vector<4x16x16xf32>
    tpu.vector_store %arg4[%c0_100, %c2_101, %c2_102], %55 {strides = array<i32>} : memref<4x20x20xf32, #tpu.memory_space<vmem>>, vector<4x16x16xf32>,
    %c0_103 = arith.constant 0 : index
    %c0_104 = arith.constant 0 : index
    %c0_105 = arith.constant 0 : index
    %60 = vector.load %arg4[%c0_103, %c0_104, %c0_105] : memref<4x20x20xf32, #tpu.memory_space<vmem>>, vector<4x16x20xf32>
    %c0_106 = arith.constant 0 : index
    %c1_107 = arith.constant 1 : index
    %c0_108 = arith.constant 0 : index
    %61 = vector.load %arg4[%c0_106, %c1_107, %c0_108] : memref<4x20x20xf32, #tpu.memory_space<vmem>>, vector<4x16x20xf32>
    %62 = arith.maximumf %60, %61 : vector<4x16x20xf32>
    %c0_109 = arith.constant 0 : index
    %c2_110 = arith.constant 2 : index
    %c0_111 = arith.constant 0 : index
    %63 = vector.load %arg4[%c0_109, %c2_110, %c0_111] : memref<4x20x20xf32, #tpu.memory_space<vmem>>, vector<4x16x20xf32>
    %64 = arith.maximumf %62, %63 : vector<4x16x20xf32>
    %c0_112 = arith.constant 0 : index
    %c3_113 = arith.constant 3 : index
    %c0_114 = arith.constant 0 : index
    %65 = vector.load %arg4[%c0_112, %c3_113, %c0_114] : memref<4x20x20xf32, #tpu.memory_space<vmem>>, vector<4x16x20xf32>
    %66 = arith.maximumf %64, %65 : vector<4x16x20xf32>
    %c0_115 = arith.constant 0 : index
    %c4_116 = arith.constant 4 : index
    %c0_117 = arith.constant 0 : index
    %67 = vector.load %arg4[%c0_115, %c4_116, %c0_117] : memref<4x20x20xf32, #tpu.memory_space<vmem>>, vector<4x16x20xf32>
    %68 = arith.maximumf %66, %67 : vector<4x16x20xf32>
    %c0_118 = arith.constant 0 : index
    %c0_119 = arith.constant 0 : index
    %c0_120 = arith.constant 0 : index
    %69 = vector.load %arg5[%c0_118, %c0_119, %c0_120] : memref<4x16x20xf32, #tpu.memory_space<vmem>>, vector<4x16x20xf32>
    tpu.vector_store %arg5[%c0_118, %c0_119, %c0_120], %68 {strides = array<i32>} : memref<4x16x20xf32, #tpu.memory_space<vmem>>, vector<4x16x20xf32>,
    %c0_121 = arith.constant 0 : index
    %c0_122 = arith.constant 0 : index
    %c0_123 = arith.constant 0 : index
    %70 = vector.load %arg5[%c0_121, %c0_122, %c0_123] : memref<4x16x20xf32, #tpu.memory_space<vmem>>, vector<4x16x16xf32>
    %c0_124 = arith.constant 0 : index
    %c0_125 = arith.constant 0 : index
    %c1_126 = arith.constant 1 : index
    %71 = vector.load %arg5[%c0_124, %c0_125, %c1_126] : memref<4x16x20xf32, #tpu.memory_space<vmem>>, vector<4x16x16xf32>
    %72 = arith.maximumf %70, %71 : vector<4x16x16xf32>
    %c0_127 = arith.constant 0 : index
    %c0_128 = arith.constant 0 : index
    %c2_129 = arith.constant 2 : index
    %73 = vector.load %arg5[%c0_127, %c0_128, %c2_129] : memref<4x16x20xf32, #tpu.memory_space<vmem>>, vector<4x16x16xf32>
    %74 = arith.maximumf %72, %73 : vector<4x16x16xf32>
    %c0_130 = arith.constant 0 : index
    %c0_131 = arith.constant 0 : index
    %c3_132 = arith.constant 3 : index
    %75 = vector.load %arg5[%c0_130, %c0_131, %c3_132] : memref<4x16x20xf32, #tpu.memory_space<vmem>>, vector<4x16x16xf32>
    %76 = arith.maximumf %74, %75 : vector<4x16x16xf32>
    %c0_133 = arith.constant 0 : index
    %c0_134 = arith.constant 0 : index
    %c4_135 = arith.constant 4 : index
    %77 = vector.load %arg5[%c0_133, %c0_134, %c4_135] : memref<4x16x20xf32, #tpu.memory_space<vmem>>, vector<4x16x16xf32>
    %78 = arith.maximumf %76, %77 : vector<4x16x16xf32>
    %c0_136 = arith.constant 0 : index
    %c3_137 = arith.constant 3 : index
    %c0_138 = arith.constant 0 : index
    %c0_139 = arith.constant 0 : index
    %c0_140 = arith.constant 0 : index
    %79 = vector.load %arg3[%c0_136, %c3_137, %c0_138, %c0_139, %c0_140] : memref<1x4x4x16x16xf32, #tpu.memory_space<vmem>>, vector<1x1x4x16x16xf32>
    %80 = vector.shape_cast %79 : vector<1x1x4x16x16xf32> to vector<4x16x16xf32>
    %81 = vector.shape_cast %78 : vector<4x16x16xf32> to vector<1x1x4x16x16xf32>
    tpu.vector_store %arg3[%c0_136, %c3_137, %c0_138, %c0_139, %c0_140], %81 {strides = array<i32>} : memref<1x4x4x16x16xf32, #tpu.memory_space<vmem>>, vector<1x1x4x16x16xf32>,
    return
  }
  func.func @transform_0(%arg0: i32, %arg1: i32) -> (i32, i32, i32, i32) {
    %c0_i32 = arith.constant 0 : i32
    %c0_i32_0 = arith.constant 0 : i32
    %c0_i32_1 = arith.constant 0 : i32
    return %arg0, %arg1, %c0_i32, %c0_i32_0 : i32, i32, i32, i32
  }
  func.func @transform_1(%arg0: i32, %arg1: i32) -> (i32, i32, i32, i32, i32) {
    %c0_i32 = arith.constant 0 : i32
    %c0_i32_0 = arith.constant 0 : i32
    %c0_i32_1 = arith.constant 0 : i32
    %c0_i32_2 = arith.constant 0 : i32
    return %arg0, %c0_i32, %arg1, %c0_i32_0, %c0_i32_1 : i32, i32, i32, i32, i32
  }
}

</mosaic_0001>

<llo_original>
// kernel: spp_layer.1
$region0: #{spp_layer.1}
  #allocation0 [shape = 'u32[]', space=smem, size = 0x4, offset = 0x4, fixed_abs, tag = 'smem constant byte address 0x4 - core index']
  #allocation1 [shape = 'u32[72,128]{1,0:T(1,128)}', space=vmem, size = 0x9000, scoped, tag = 'internal scratch']
  #allocation2 [shape = 'f32[4,20,20]{2,1,0:T(8,128)}', space=vmem, size = 0xc000, scoped, tag = 'scratch operand']
  #allocation3 [shape = 'f32[4,16,20]{2,1,0:T(8,128)}', space=vmem, size = 0x8000, scoped, tag = 'scratch operand']
  %s0 = inlined_call_operand.hbm [shape: f32[2,4,16,16], index: 0, kind: input, shape index: {}]
  %s1 = inlined_call_operand.hbm [shape: f32[2,4,4,16,16], index: 1, kind: output, shape index: {}]
  %s2 = sld [smem:[#allocation0]]
  $region41: #{spp_layer.1} parent=0
    _
  %s4 = ssub.s32 1, %s2
  %s5 = scalar_select 0, %s4, %s2
  $region1: #{spp_layer.1} parent=0
    #allocation4 [shape = 'u8[65536]{0}', space=vmem, size = 0x10000, scoped, tag = 'input window, operand 0']
    #allocation5 [shape = 's32[2]{0}', space=sflag, size = 0x8, scoped, tag = 'scoped memory for spp_layer.1']
    #allocation6 [shape = 's32[2]{0}', space=sflag, size = 0x8, scoped, tag = 'scoped memory for spp_layer.1']
    #allocation7 [shape = 'u8[262144]{0}', space=vmem, size = 0x40000, scoped, tag = 'output window, operand 0']
    %6 = vsyncpa [#allocation5], 0
    %s7 = scalar_lea.sflag [#allocation5], 1
    %8 = vsyncpa %s7, 0
    %9 = vsyncpa [#allocation6], 0
    %s10 = scalar_lea.sflag [#allocation6], 1
    %11 = vsyncpa %s10, 0
    loop: start=0, step=1, limit=4
    $region2: #{spp_layer.1} parent=1 // loop_pre_header
      _
    $region3: #{spp_layer.1} parent=1 // loop_header
      %s13 = sphi 0, %s17
      %p14 = scmp.ge.s32.totalorder %s13, 4
      %s20 = sphi 0, %s32
      %s21 = sphi 0, %s28
      %s22 = sphi 0, %s20
      %s23 = sphi 0, %s21
      %s24 = sphi 0, %s22
      %s25 = sphi 0, %s23
      %s37 = sphi 0, %s39
      %s40 = sphi 0, %s37
      %s41 = sphi 0, %s40
      %s57 = sphi 0, %s41
      %s65 = sphi 0, %s67
      %s68 = sphi 0, %s65
      %s69 = sphi 0, %s68
      %s85 = sphi 0, %s69
    $region4: #{spp_layer.1} parent=1 // loop_header_branch
      %16 = sbr.rel (%p14) target = $region8
    $region5: #{spp_layer.1} parent=1 // loop_body
      %s18 = ssub.s32 %s13, 1
      %s19 = ssub.s32 %s13, 2
      %s26 = sadd.s32 1, %s21
      %p27 = scmp.ge.s32.totalorder %s26, 1
      %s28 = scalar_select %p27, 0, %s26
      %s29 = sadd.s32 1, %s20
      %s30 = scalar_select %p27, %s29, %s20
      %p31 = scmp.ge.s32.totalorder %s30, 2
      %s32 = scalar_select %p31, 0, %s30
      %s33 = ssub.s32 %s20, %s32
      %s34 = ssub.s32 %s21, %s28
      %s35 = sor.u32 %s33, %s34
      %p36 = scmp.eq.s32.totalorder %s35, 0
      %s38 = sadd.s32 %s37, 1
      %s39 = scalar_select %p36, %s37, %s38
      %p42 = pneg %p36
      %p43 = scmp.eq.s32.totalorder %s13, 1
      %p44 = por %p42, %p43
      %p45 = scmp.ne.s32.totalorder %s37, %s40
      %p46 = scmp.eq.s32.totalorder %s13, 0
      %p47 = por %p45, %p46
      %p48 = scmp.ne.s32.totalorder %s37, %s40
      %p49 = scmp.eq.s32.totalorder %s18, 1
      %p50 = por %p48, %p49
      %p51 = scmp.ne.s32.totalorder %s40, %s41
      %p52 = scmp.eq.s32.totalorder %s18, 0
      %p53 = por %p51, %p52
      %p54 = scmp.ne.s32.totalorder %s40, %s41
      %p55 = scmp.eq.s32.totalorder %s19, 1
      %p56 = por %p54, %p55
      %p58 = scmp.ne.s32.totalorder %s41, %s57
      %p59 = scmp.eq.s32.totalorder %s19, 0
      %p60 = por %p58, %p59
      %s61 = ssub.s32 %s20, %s32
      %s62 = ssub.s32 %s21, %s28
      %s63 = sor.u32 %s61, %s62
      %p64 = scmp.eq.s32.totalorder %s63, 0
      %s66 = sadd.s32 %s65, 1
      %s67 = scalar_select %p64, %s65, %s66
      %p70 = pneg %p64
      %p71 = scmp.eq.s32.totalorder %s13, 1
      %p72 = por %p70, %p71
      %p73 = scmp.ne.s32.totalorder %s65, %s68
      %p74 = scmp.eq.s32.totalorder %s13, 0
      %p75 = por %p73, %p74
      %p76 = scmp.ne.s32.totalorder %s65, %s68
      %p77 = scmp.eq.s32.totalorder %s18, 1
      %p78 = por %p76, %p77
      %p79 = scmp.ne.s32.totalorder %s68, %s69
      %p80 = scmp.eq.s32.totalorder %s18, 0
      %p81 = por %p79, %p80
      %p82 = scmp.ne.s32.totalorder %s68, %s69
      %p83 = scmp.eq.s32.totalorder %s19, 1
      %p84 = por %p82, %p83
      %p86 = scmp.ne.s32.totalorder %s69, %s85
      %p87 = scmp.eq.s32.totalorder %s19, 0
      %p88 = por %p86, %p87
      %p89 = scmp.le.s32.totalorder 1, %s13
      %p90 = scmp.lt.s32.totalorder %s13, 3
      %p91 = pnand %p89, %p90
      %p92 = pneg %p91
      // Predicated region
      $region9: #{spp_layer.1} parent=5 // pred_check
        _
      $region10: #{spp_layer.1} parent=5 // pred_check_branch
        %94 = sbr.rel (%p91) target = $region12
      $region11: #{spp_layer.1} parent=5 // pred_region
        %s95 = ssub.s32 %s13, 1
      $region12: #{spp_layer.1} parent=5 // pred_fallthru
        _
      %p96 = scmp.lt.s32.totalorder %s13, 2
      // Predicated region
      $region13: #{spp_layer.1} parent=5 // pred_check
        %p97 = pneg %p96
      $region14: #{spp_layer.1} parent=5 // pred_check_branch
        %99 = sbr.rel (%p97) target = $region16
      $region15: #{spp_layer.1} parent=5 // pred_region
        // Predicated region
        $region17: #{spp_layer.1} parent=15 // pred_check
          %p100 = pneg %p47
        $region18: #{spp_layer.1} parent=15 // pred_check_branch
          %102 = sbr.rel (%p100) target = $region20
        $region19: #{spp_layer.1} parent=15 // pred_region
          %s103 = sand.u32 %s37, 1
          %s104 = scalar_lea.sflag [#allocation5], %s103
          %s105 = sand.u32 %s37, 1
          %s106 = smul.addr %s105, 64
          %s107 = scalar_lea.vmem [#allocation4], %s106
          %s108 = smul.u32 4, %s21
          %110 = vsyncadd %s104, 0
          %s111 = smul.addr %s108, 2
          %s112 = smul.addr %s20, 8
          %s113 = sadd.s32 %s111, %s112
          %s114 = smul.addr %s113, 8
          %s115 = scalar_lea.hbm %s0, %s114
          %s116 = sshll.u32 %s115, 4
          %s117 = int_to_ptr.hbm [resolvable:$true] %s116
          %s118 = sshll.u32 %s107, 4
          %s119 = int_to_ptr.vmem [resolvable:$true] %s118
          %124 = dma.hbm_to_vmem [thread:$0]  %s117, 1024, %s119, %s104, 128, 128, 8
        $region20: #{spp_layer.1} parent=15 // pred_fallthru
          _
      $region16: #{spp_layer.1} parent=5 // pred_fallthru
        _
      %p125 = scmp.le.s32.totalorder 1, %s13
      %p126 = scmp.lt.s32.totalorder %s13, 3
      %p127 = pnand %p125, %p126
      %p128 = pneg %p127
      // Predicated region
      $region21: #{spp_layer.1} parent=5 // pred_check
        _
      $region22: #{spp_layer.1} parent=5 // pred_check_branch
        %130 = sbr.rel (%p127) target = $region24
      $region23: #{spp_layer.1} parent=5 // pred_region
        %s131 = ssub.s32 %s13, 1
        %s132 = sand.u32 %s40, 1
        %s133 = scalar_lea.sflag [#allocation5], %s132
        %s134 = sand.u32 %s40, 1
        %s135 = smul.addr %s134, 64
        %s136 = scalar_lea.vmem [#allocation4], %s135
        // Predicated region
        $region25: #{spp_layer.1} parent=23 // pred_check
          %p137 = pneg %p53
        $region26: #{spp_layer.1} parent=23 // pred_check_branch
          %139 = sbr.rel (%p137) target = $region28
        $region27: #{spp_layer.1} parent=23 // pred_region
          %141 = dma.done %s133, 1024
        $region28: #{spp_layer.1} parent=23 // pred_fallthru
          _
        %s142 = sand.u32 %s40, 1
        %s143 = scalar_lea.sflag [#allocation5], %s142
        %s144 = sand.u32 %s40, 1
        %s145 = smul.addr %s144, 64
        %s146 = scalar_lea.vmem [#allocation4], %s145
        %p147 = pneg %p53
        %p148 = pneg %p50
        %p149 = pneg %p81
        %p150 = pneg %p78
        %s151 = sand.u32 %s68, 1
        %s152 = scalar_lea.sflag [#allocation6], %s151
        %s153 = sand.u32 %s68, 1
        %s154 = smul.addr %s153, 256
        %s155 = scalar_lea.vmem [#allocation7], %s154
        %s156 = smul.u32 4, %s23
        %s157 = smul.u32 4, %s23
        %v158 = vld [vmem:[%s136] sm:$0xff]
        %v159 = vld [vmem:[%s136 + $0x8] sm:$0xff]
        %v160 = vld [vmem:[%s136 + $0x10] sm:$0xff]
        %v161 = vld [vmem:[%s136 + $0x18] sm:$0xff]
        %v162 = vld [vmem:[%s136 + $0x20] sm:$0xff]
        %v163 = vld [vmem:[%s136 + $0x28] sm:$0xff]
        %v164 = vld [vmem:[%s136 + $0x30] sm:$0xff]
        %v165 = vld [vmem:[%s136 + $0x38] sm:$0xff]
        %vm166 = vcmask 130048
        %167 = vst.msk [vmem:[%s155] sm:$0xff] %vm166, %v158
        %168 = vst.msk [vmem:[%s155 + $0x8] sm:$0xff] %vm166, %v159
        %169 = vst.msk [vmem:[%s155 + $0x10] sm:$0xff] %vm166, %v160
        %170 = vst.msk [vmem:[%s155 + $0x18] sm:$0xff] %vm166, %v161
        %171 = vst.msk [vmem:[%s155 + $0x20] sm:$0xff] %vm166, %v162
        %172 = vst.msk [vmem:[%s155 + $0x28] sm:$0xff] %vm166, %v163
        %173 = vst.msk [vmem:[%s155 + $0x30] sm:$0xff] %vm166, %v164
        %174 = vst.msk [vmem:[%s155 + $0x38] sm:$0xff] %vm166, %v165
        %vm175 = vcmask 156672
        %176 = vst.msk [vmem:[#allocation2] sm:$0x3] %vm175, -inf
        %177 = vst.msk [vmem:[#allocation2 + $0x18] sm:$0x3] %vm175, -inf
        %178 = vst.msk [vmem:[#allocation2 + $0x30] sm:$0x3] %vm175, -inf
        %179 = vst.msk [vmem:[#allocation2 + $0x48] sm:$0x3] %vm175, -inf
        %180 = vst.msk [vmem:[#allocation2 + $0x12] sm:$0x3] %vm175, -inf
        %181 = vst.msk [vmem:[#allocation2 + $0x2a] sm:$0x3] %vm175, -inf
        %182 = vst.msk [vmem:[#allocation2 + $0x42] sm:$0x3] %vm175, -inf
        %183 = vst.msk [vmem:[#allocation2 + $0x5a] sm:$0x3] %vm175, -inf
        %vm184 = vcmask 15360
        %185 = vst.msk [vmem:[#allocation2] sm:$0xff] %vm184, -inf
        %186 = vst.msk [vmem:[#allocation2 + $0x8] sm:$0xff] %vm184, -inf
        %vm187 = vcmask 11264
        %188 = vst.msk [vmem:[#allocation2 + $0x10] sm:$0xf] %vm187, -inf
        %189 = vst.msk [vmem:[#allocation2 + $0x18] sm:$0xff] %vm184, -inf
        %190 = vst.msk [vmem:[#allocation2 + $0x20] sm:$0xff] %vm184, -inf
        %191 = vst.msk [vmem:[#allocation2 + $0x28] sm:$0xf] %vm187, -inf
        %192 = vst.msk [vmem:[#allocation2 + $0x30] sm:$0xff] %vm184, -inf
        %193 = vst.msk [vmem:[#allocation2 + $0x38] sm:$0xff] %vm184, -inf
        %194 = vst.msk [vmem:[#allocation2 + $0x40] sm:$0xf] %vm187, -inf
        %195 = vst.msk [vmem:[#allocation2 + $0x48] sm:$0xff] %vm184, -inf
        %196 = vst.msk [vmem:[#allocation2 + $0x50] sm:$0xff] %vm184, -inf
        %197 = vst.msk [vmem:[#allocation2 + $0x58] sm:$0xf] %vm187, -inf
        %vm198 = vcmask 162960
        %199 = vst.msk [vmem:[#allocation2] sm:$0xff] %vm198, -inf
        %200 = vst.msk [vmem:[#allocation2 + $0x8] sm:$0xff] %vm198, -inf
        %vm201 = vcmask 158864
        %202 = vst.msk [vmem:[#allocation2 + $0x10] sm:$0xf] %vm201, -inf
        %203 = vst.msk [vmem:[#allocation2 + $0x18] sm:$0xff] %vm198, -inf
        %204 = vst.msk [vmem:[#allocation2 + $0x20] sm:$0xff] %vm198, -inf
        %205 = vst.msk [vmem:[#allocation2 + $0x28] sm:$0xf] %vm201, -inf
        %206 = vst.msk [vmem:[#allocation2 + $0x30] sm:$0xff] %vm198, -inf
        %207 = vst.msk [vmem:[#allocation2 + $0x38] sm:$0xff] %vm198, -inf
        %208 = vst.msk [vmem:[#allocation2 + $0x40] sm:$0xf] %vm201, -inf
        %209 = vst.msk [vmem:[#allocation2 + $0x48] sm:$0xff] %vm198, -inf
        %210 = vst.msk [vmem:[#allocation2 + $0x50] sm:$0xff] %vm198, -inf
        %211 = vst.msk [vmem:[#allocation2 + $0x58] sm:$0xf] %vm201, -inf
        %220 = vrot.lane.b32.xlu0 %v158, 2
        %v221 = vpop.permute.xlu0 %220
        %222 = vrot.lane.b32.xlu0 %v159, 2
        %v223 = vpop.permute.xlu0 %222
        %224 = vrot.lane.b32.xlu0 %v160, 2
        %v225 = vpop.permute.xlu0 %224
        %226 = vrot.lane.b32.xlu0 %v161, 2
        %v227 = vpop.permute.xlu0 %226
        %228 = vrot.lane.b32.xlu0 %v162, 2
        %v229 = vpop.permute.xlu0 %228
        %230 = vrot.lane.b32.xlu0 %v163, 2
        %v231 = vpop.permute.xlu0 %230
        %232 = vrot.lane.b32.xlu0 %v164, 2
        %v233 = vpop.permute.xlu0 %232
        %234 = vrot.lane.b32.xlu0 %v165, 2
        %v235 = vpop.permute.xlu0 %234
        %vm244 = vcmask 146448
        %245 = vst.msk [vmem:[#allocation2 + $0x2] sm:$0xff] %vm244, %v221
        %246 = vst.msk [vmem:[#allocation2 + $0xa] sm:$0xff] %vm244, %v223
        %247 = vst.msk [vmem:[#allocation2 + $0x1a] sm:$0xff] %vm244, %v225
        %248 = vst.msk [vmem:[#allocation2 + $0x22] sm:$0xff] %vm244, %v227
        %249 = vst.msk [vmem:[#allocation2 + $0x32] sm:$0xff] %vm244, %v229
        %250 = vst.msk [vmem:[#allocation2 + $0x3a] sm:$0xff] %vm244, %v231
        %251 = vst.msk [vmem:[#allocation2 + $0x4a] sm:$0xff] %vm244, %v233
        %252 = vst.msk [vmem:[#allocation2 + $0x52] sm:$0xff] %vm244, %v235
        %v253 = vld [vmem:[#allocation2] sm:$0xff]
        %v254 = vld [vmem:[#allocation2 + $0x8] sm:$0xff]
        %v255 = vld [vmem:[#allocation2 + $0x18] sm:$0xff]
        %v256 = vld [vmem:[#allocation2 + $0x20] sm:$0xff]
        %v257 = vld [vmem:[#allocation2 + $0x30] sm:$0xff]
        %v258 = vld [vmem:[#allocation2 + $0x38] sm:$0xff]
        %v259 = vld [vmem:[#allocation2 + $0x48] sm:$0xff]
        %v260 = vld [vmem:[#allocation2 + $0x50] sm:$0xff]
        %v261 = vld [vmem:[#allocation2 + $0x1] sm:$0xff]
        %v262 = vld [vmem:[#allocation2 + $0x9] sm:$0xff]
        %v263 = vld [vmem:[#allocation2 + $0x19] sm:$0xff]
        %v264 = vld [vmem:[#allocation2 + $0x21] sm:$0xff]
        %v265 = vld [vmem:[#allocation2 + $0x31] sm:$0xff]
        %v266 = vld [vmem:[#allocation2 + $0x39] sm:$0xff]
        %v267 = vld [vmem:[#allocation2 + $0x49] sm:$0xff]
        %v268 = vld [vmem:[#allocation2 + $0x51] sm:$0xff]
        %v269 = vmax.f32 %v253, %v261
        %v270 = vmax.f32 %v254, %v262
        %v271 = vmax.f32 %v255, %v263
        %v272 = vmax.f32 %v256, %v264
        %v273 = vmax.f32 %v257, %v265
        %v274 = vmax.f32 %v258, %v266
        %v275 = vmax.f32 %v259, %v267
        %v276 = vmax.f32 %v260, %v268
        %v277 = vld [vmem:[#allocation2 + $0x2] sm:$0xff]
        %v278 = vld [vmem:[#allocation2 + $0xa] sm:$0xff]
        %v279 = vld [vmem:[#allocation2 + $0x1a] sm:$0xff]
        %v280 = vld [vmem:[#allocation2 + $0x22] sm:$0xff]
        %v281 = vld [vmem:[#allocation2 + $0x32] sm:$0xff]
        %v282 = vld [vmem:[#allocation2 + $0x3a] sm:$0xff]
        %v283 = vld [vmem:[#allocation2 + $0x4a] sm:$0xff]
        %v284 = vld [vmem:[#allocation2 + $0x52] sm:$0xff]
        %v285 = vmax.f32 %v269, %v277
        %v286 = vmax.f32 %v270, %v278
        %v287 = vmax.f32 %v271, %v279
        %v288 = vmax.f32 %v272, %v280
        %v289 = vmax.f32 %v273, %v281
        %v290 = vmax.f32 %v274, %v282
        %v291 = vmax.f32 %v275, %v283
        %v292 = vmax.f32 %v276, %v284
        %v293 = vld [vmem:[#allocation2 + $0x3] sm:$0xff]
        %v294 = vld [vmem:[#allocation2 + $0xb] sm:$0xff]
        %v295 = vld [vmem:[#allocation2 + $0x1b] sm:$0xff]
        %v296 = vld [vmem:[#allocation2 + $0x23] sm:$0xff]
        %v297 = vld [vmem:[#allocation2 + $0x33] sm:$0xff]
        %v298 = vld [vmem:[#allocation2 + $0x3b] sm:$0xff]
        %v299 = vld [vmem:[#allocation2 + $0x4b] sm:$0xff]
        %v300 = vld [vmem:[#allocation2 + $0x53] sm:$0xff]
        %v301 = vmax.f32 %v285, %v293
        %v302 = vmax.f32 %v286, %v294
        %v303 = vmax.f32 %v287, %v295
        %v304 = vmax.f32 %v288, %v296
        %v305 = vmax.f32 %v289, %v297
        %v306 = vmax.f32 %v290, %v298
        %v307 = vmax.f32 %v291, %v299
        %v308 = vmax.f32 %v292, %v300
        %v309 = vld [vmem:[#allocation2 + $0x4] sm:$0xff]
        %v310 = vld [vmem:[#allocation2 + $0xc] sm:$0xff]
        %v311 = vld [vmem:[#allocation2 + $0x1c] sm:$0xff]
        %v312 = vld [vmem:[#allocation2 + $0x24] sm:$0xff]
        %v313 = vld [vmem:[#allocation2 + $0x34] sm:$0xff]
        %v314 = vld [vmem:[#allocation2 + $0x3c] sm:$0xff]
        %v315 = vld [vmem:[#allocation2 + $0x4c] sm:$0xff]
        %v316 = vld [vmem:[#allocation2 + $0x54] sm:$0xff]
        %v317 = vmax.f32 %v301, %v309
        %v318 = vmax.f32 %v302, %v310
        %v319 = vmax.f32 %v303, %v311
        %v320 = vmax.f32 %v304, %v312
        %v321 = vmax.f32 %v305, %v313
        %v322 = vmax.f32 %v306, %v314
        %v323 = vmax.f32 %v307, %v315
        %v324 = vmax.f32 %v308, %v316
        %vm325 = vcmask 162816
        %326 = vst.msk [vmem:[#allocation3] sm:$0xff] %vm325, %v317
        %327 = vst.msk [vmem:[#allocation3 + $0x8] sm:$0xff] %vm325, %v318
        %328 = vst.msk [vmem:[#allocation3 + $0x10] sm:$0xff] %vm325, %v319
        %329 = vst.msk [vmem:[#allocation3 + $0x18] sm:$0xff] %vm325, %v320
        %330 = vst.msk [vmem:[#allocation3 + $0x20] sm:$0xff] %vm325, %v321
        %331 = vst.msk [vmem:[#allocation3 + $0x28] sm:$0xff] %vm325, %v322
        %332 = vst.msk [vmem:[#allocation3 + $0x30] sm:$0xff] %vm325, %v323
        %333 = vst.msk [vmem:[#allocation3 + $0x38] sm:$0xff] %vm325, %v324
        %v334 = vld [vmem:[#allocation3] sm:$0xff]
        %v335 = vld [vmem:[#allocation3 + $0x8] sm:$0xff]
        %v336 = vld [vmem:[#allocation3 + $0x10] sm:$0xff]
        %v337 = vld [vmem:[#allocation3 + $0x18] sm:$0xff]
        %v338 = vld [vmem:[#allocation3 + $0x20] sm:$0xff]
        %v339 = vld [vmem:[#allocation3 + $0x28] sm:$0xff]
        %v340 = vld [vmem:[#allocation3 + $0x30] sm:$0xff]
        %v341 = vld [vmem:[#allocation3 + $0x38] sm:$0xff]
        %350 = vrot.lane.b32.xlu0 %v334, 127
        %v351 = vpop.permute.xlu0 %350
        %352 = vrot.lane.b32.xlu0 %v335, 127
        %v353 = vpop.permute.xlu0 %352
        %354 = vrot.lane.b32.xlu0 %v336, 127
        %v355 = vpop.permute.xlu0 %354
        %356 = vrot.lane.b32.xlu0 %v337, 127
        %v357 = vpop.permute.xlu0 %356
        %358 = vrot.lane.b32.xlu0 %v338, 127
        %v359 = vpop.permute.xlu0 %358
        %360 = vrot.lane.b32.xlu0 %v339, 127
        %v361 = vpop.permute.xlu0 %360
        %362 = vrot.lane.b32.xlu0 %v340, 127
        %v363 = vpop.permute.xlu0 %362
        %364 = vrot.lane.b32.xlu0 %v341, 127
        %v365 = vpop.permute.xlu0 %364
        %v374 = vmax.f32 %v334, %v351
        %v375 = vmax.f32 %v335, %v353
        %v376 = vmax.f32 %v336, %v355
        %v377 = vmax.f32 %v337, %v357
        %v378 = vmax.f32 %v338, %v359
        %v379 = vmax.f32 %v339, %v361
        %v380 = vmax.f32 %v340, %v363
        %v381 = vmax.f32 %v341, %v365
        %382 = vrot.lane.b32.xlu0 %v334, 126
        %v383 = vpop.permute.xlu0 %382
        %384 = vrot.lane.b32.xlu0 %v335, 126
        %v385 = vpop.permute.xlu0 %384
        %386 = vrot.lane.b32.xlu0 %v336, 126
        %v387 = vpop.permute.xlu0 %386
        %388 = vrot.lane.b32.xlu0 %v337, 126
        %v389 = vpop.permute.xlu0 %388
        %390 = vrot.lane.b32.xlu0 %v338, 126
        %v391 = vpop.permute.xlu0 %390
        %392 = vrot.lane.b32.xlu0 %v339, 126
        %v393 = vpop.permute.xlu0 %392
        %394 = vrot.lane.b32.xlu0 %v340, 126
        %v395 = vpop.permute.xlu0 %394
        %396 = vrot.lane.b32.xlu0 %v341, 126
        %v397 = vpop.permute.xlu0 %396
        %v406 = vmax.f32 %v374, %v383
        %v407 = vmax.f32 %v375, %v385
        %v408 = vmax.f32 %v376, %v387
        %v409 = vmax.f32 %v377, %v389
        %v410 = vmax.f32 %v378, %v391
        %v411 = vmax.f32 %v379, %v393
        %v412 = vmax.f32 %v380, %v395
        %v413 = vmax.f32 %v381, %v397
        %414 = vrot.lane.b32.xlu0 %v334, 125
        %v415 = vpop.permute.xlu0 %414
        %416 = vrot.lane.b32.xlu0 %v335, 125
        %v417 = vpop.permute.xlu0 %416
        %418 = vrot.lane.b32.xlu0 %v336, 125
        %v419 = vpop.permute.xlu0 %418
        %420 = vrot.lane.b32.xlu0 %v337, 125
        %v421 = vpop.permute.xlu0 %420
        %422 = vrot.lane.b32.xlu0 %v338, 125
        %v423 = vpop.permute.xlu0 %422
        %424 = vrot.lane.b32.xlu0 %v339, 125
        %v425 = vpop.permute.xlu0 %424
        %426 = vrot.lane.b32.xlu0 %v340, 125
        %v427 = vpop.permute.xlu0 %426
        %428 = vrot.lane.b32.xlu0 %v341, 125
        %v429 = vpop.permute.xlu0 %428
        %v438 = vmax.f32 %v406, %v415
        %v439 = vmax.f32 %v407, %v417
        %v440 = vmax.f32 %v408, %v419
        %v441 = vmax.f32 %v409, %v421
        %v442 = vmax.f32 %v410, %v423
        %v443 = vmax.f32 %v411, %v425
        %v444 = vmax.f32 %v412, %v427
        %v445 = vmax.f32 %v413, %v429
        %446 = vrot.lane.b32.xlu0 %v334, 124
        %v447 = vpop.permute.xlu0 %446
        %448 = vrot.lane.b32.xlu0 %v335, 124
        %v449 = vpop.permute.xlu0 %448
        %450 = vrot.lane.b32.xlu0 %v336, 124
        %v451 = vpop.permute.xlu0 %450
        %452 = vrot.lane.b32.xlu0 %v337, 124
        %v453 = vpop.permute.xlu0 %452
        %454 = vrot.lane.b32.xlu0 %v338, 124
        %v455 = vpop.permute.xlu0 %454
        %456 = vrot.lane.b32.xlu0 %v339, 124
        %v457 = vpop.permute.xlu0 %456
        %458 = vrot.lane.b32.xlu0 %v340, 124
        %v459 = vpop.permute.xlu0 %458
        %460 = vrot.lane.b32.xlu0 %v341, 124
        %v461 = vpop.permute.xlu0 %460
        %v470 = vmax.f32 %v438, %v447
        %v471 = vmax.f32 %v439, %v449
        %v472 = vmax.f32 %v440, %v451
        %v473 = vmax.f32 %v441, %v453
        %v474 = vmax.f32 %v442, %v455
        %v475 = vmax.f32 %v443, %v457
        %v476 = vmax.f32 %v444, %v459
        %v477 = vmax.f32 %v445, %v461
        %s478 = scalar_lea.vmem %s155, 64 [#allocation7]
        %479 = vst.msk [vmem:[%s478] sm:$0xff] %vm166, %v470
        %480 = vst.msk [vmem:[%s478 + $0x8] sm:$0xff] %vm166, %v471
        %481 = vst.msk [vmem:[%s478 + $0x10] sm:$0xff] %vm166, %v472
        %482 = vst.msk [vmem:[%s478 + $0x18] sm:$0xff] %vm166, %v473
        %483 = vst.msk [vmem:[%s478 + $0x20] sm:$0xff] %vm166, %v474
        %484 = vst.msk [vmem:[%s478 + $0x28] sm:$0xff] %vm166, %v475
        %485 = vst.msk [vmem:[%s478 + $0x30] sm:$0xff] %vm166, %v476
        %486 = vst.msk [vmem:[%s478 + $0x38] sm:$0xff] %vm166, %v477
        %495 = vrot.lane.b32.xlu0 %v470, 2
        %v496 = vpop.permute.xlu0 %495
        %497 = vrot.lane.b32.xlu0 %v471, 2
        %v498 = vpop.permute.xlu0 %497
        %499 = vrot.lane.b32.xlu0 %v472, 2
        %v500 = vpop.permute.xlu0 %499
        %501 = vrot.lane.b32.xlu0 %v473, 2
        %v502 = vpop.permute.xlu0 %501
        %503 = vrot.lane.b32.xlu0 %v474, 2
        %v504 = vpop.permute.xlu0 %503
        %505 = vrot.lane.b32.xlu0 %v475, 2
        %v506 = vpop.permute.xlu0 %505
        %507 = vrot.lane.b32.xlu0 %v476, 2
        %v508 = vpop.permute.xlu0 %507
        %509 = vrot.lane.b32.xlu0 %v477, 2
        %v510 = vpop.permute.xlu0 %509
        %519 = vst.msk [vmem:[#allocation2 + $0x2] sm:$0xff] %vm244, %v496
        %520 = vst.msk [vmem:[#allocation2 + $0xa] sm:$0xff] %vm244, %v498
        %521 = vst.msk [vmem:[#allocation2 + $0x1a] sm:$0xff] %vm244, %v500
        %522 = vst.msk [vmem:[#allocation2 + $0x22] sm:$0xff] %vm244, %v502
        %523 = vst.msk [vmem:[#allocation2 + $0x32] sm:$0xff] %vm244, %v504
        %524 = vst.msk [vmem:[#allocation2 + $0x3a] sm:$0xff] %vm244, %v506
        %525 = vst.msk [vmem:[#allocation2 + $0x4a] sm:$0xff] %vm244, %v508
        %526 = vst.msk [vmem:[#allocation2 + $0x52] sm:$0xff] %vm244, %v510
        %v527 = vld [vmem:[#allocation2] sm:$0xff]
        %v528 = vld [vmem:[#allocation2 + $0x8] sm:$0xff]
        %v529 = vld [vmem:[#allocation2 + $0x18] sm:$0xff]
        %v530 = vld [vmem:[#allocation2 + $0x20] sm:$0xff]
        %v531 = vld [vmem:[#allocation2 + $0x30] sm:$0xff]
        %v532 = vld [vmem:[#allocation2 + $0x38] sm:$0xff]
        %v533 = vld [vmem:[#allocation2 + $0x48] sm:$0xff]
        %v534 = vld [vmem:[#allocation2 + $0x50] sm:$0xff]
        %v535 = vld [vmem:[#allocation2 + $0x1] sm:$0xff]
        %v536 = vld [vmem:[#allocation2 + $0x9] sm:$0xff]
        %v537 = vld [vmem:[#allocation2 + $0x19] sm:$0xff]
        %v538 = vld [vmem:[#allocation2 + $0x21] sm:$0xff]
        %v539 = vld [vmem:[#allocation2 + $0x31] sm:$0xff]
        %v540 = vld [vmem:[#allocation2 + $0x39] sm:$0xff]
        %v541 = vld [vmem:[#allocation2 + $0x49] sm:$0xff]
        %v542 = vld [vmem:[#allocation2 + $0x51] sm:$0xff]
        %v543 = vmax.f32 %v527, %v535
        %v544 = vmax.f32 %v528, %v536
        %v545 = vmax.f32 %v529, %v537
        %v546 = vmax.f32 %v530, %v538
        %v547 = vmax.f32 %v531, %v539
        %v548 = vmax.f32 %v532, %v540
        %v549 = vmax.f32 %v533, %v541
        %v550 = vmax.f32 %v534, %v542
        %v551 = vld [vmem:[#allocation2 + $0x2] sm:$0xff]
        %v552 = vld [vmem:[#allocation2 + $0xa] sm:$0xff]
        %v553 = vld [vmem:[#allocation2 + $0x1a] sm:$0xff]
        %v554 = vld [vmem:[#allocation2 + $0x22] sm:$0xff]
        %v555 = vld [vmem:[#allocation2 + $0x32] sm:$0xff]
        %v556 = vld [vmem:[#allocation2 + $0x3a] sm:$0xff]
        %v557 = vld [vmem:[#allocation2 + $0x4a] sm:$0xff]
        %v558 = vld [vmem:[#allocation2 + $0x52] sm:$0xff]
        %v559 = vmax.f32 %v543, %v551
        %v560 = vmax.f32 %v544, %v552
        %v561 = vmax.f32 %v545, %v553
        %v562 = vmax.f32 %v546, %v554
        %v563 = vmax.f32 %v547, %v555
        %v564 = vmax.f32 %v548, %v556
        %v565 = vmax.f32 %v549, %v557
        %v566 = vmax.f32 %v550, %v558
        %v567 = vld [vmem:[#allocation2 + $0x3] sm:$0xff]
        %v568 = vld [vmem:[#allocation2 + $0xb] sm:$0xff]
        %v569 = vld [vmem:[#allocation2 + $0x1b] sm:$0xff]
        %v570 = vld [vmem:[#allocation2 + $0x23] sm:$0xff]
        %v571 = vld [vmem:[#allocation2 + $0x33] sm:$0xff]
        %v572 = vld [vmem:[#allocation2 + $0x3b] sm:$0xff]
        %v573 = vld [vmem:[#allocation2 + $0x4b] sm:$0xff]
        %v574 = vld [vmem:[#allocation2 + $0x53] sm:$0xff]
        %v575 = vmax.f32 %v559, %v567
        %v576 = vmax.f32 %v560, %v568
        %v577 = vmax.f32 %v561, %v569
        %v578 = vmax.f32 %v562, %v570
        %v579 = vmax.f32 %v563, %v571
        %v580 = vmax.f32 %v564, %v572
        %v581 = vmax.f32 %v565, %v573
        %v582 = vmax.f32 %v566, %v574
        %v583 = vld [vmem:[#allocation2 + $0x4] sm:$0xff]
        %v584 = vld [vmem:[#allocation2 + $0xc] sm:$0xff]
        %v585 = vld [vmem:[#allocation2 + $0x1c] sm:$0xff]
        %v586 = vld [vmem:[#allocation2 + $0x24] sm:$0xff]
        %v587 = vld [vmem:[#allocation2 + $0x34] sm:$0xff]
        %v588 = vld [vmem:[#allocation2 + $0x3c] sm:$0xff]
        %v589 = vld [vmem:[#allocation2 + $0x4c] sm:$0xff]
        %v590 = vld [vmem:[#allocation2 + $0x54] sm:$0xff]
        %v591 = vmax.f32 %v575, %v583
        %v592 = vmax.f32 %v576, %v584
        %v593 = vmax.f32 %v577, %v585
        %v594 = vmax.f32 %v578, %v586
        %v595 = vmax.f32 %v579, %v587
        %v596 = vmax.f32 %v580, %v588
        %v597 = vmax.f32 %v581, %v589
        %v598 = vmax.f32 %v582, %v590
        %599 = vst.msk [vmem:[#allocation3] sm:$0xff] %vm325, %v591
        %600 = vst.msk [vmem:[#allocation3 + $0x8] sm:$0xff] %vm325, %v592
        %601 = vst.msk [vmem:[#allocation3 + $0x10] sm:$0xff] %vm325, %v593
        %602 = vst.msk [vmem:[#allocation3 + $0x18] sm:$0xff] %vm325, %v594
        %603 = vst.msk [vmem:[#allocation3 + $0x20] sm:$0xff] %vm325, %v595
        %604 = vst.msk [vmem:[#allocation3 + $0x28] sm:$0xff] %vm325, %v596
        %605 = vst.msk [vmem:[#allocation3 + $0x30] sm:$0xff] %vm325, %v597
        %606 = vst.msk [vmem:[#allocation3 + $0x38] sm:$0xff] %vm325, %v598
        %v607 = vld [vmem:[#allocation3] sm:$0xff]
        %v608 = vld [vmem:[#allocation3 + $0x8] sm:$0xff]
        %v609 = vld [vmem:[#allocation3 + $0x10] sm:$0xff]
        %v610 = vld [vmem:[#allocation3 + $0x18] sm:$0xff]
        %v611 = vld [vmem:[#allocation3 + $0x20] sm:$0xff]
        %v612 = vld [vmem:[#allocation3 + $0x28] sm:$0xff]
        %v613 = vld [vmem:[#allocation3 + $0x30] sm:$0xff]
        %v614 = vld [vmem:[#allocation3 + $0x38] sm:$0xff]
        %623 = vrot.lane.b32.xlu0 %v607, 127
        %v624 = vpop.permute.xlu0 %623
        %625 = vrot.lane.b32.xlu0 %v608, 127
        %v626 = vpop.permute.xlu0 %625
        %627 = vrot.lane.b32.xlu0 %v609, 127
        %v628 = vpop.permute.xlu0 %627
        %629 = vrot.lane.b32.xlu0 %v610, 127
        %v630 = vpop.permute.xlu0 %629
        %631 = vrot.lane.b32.xlu0 %v611, 127
        %v632 = vpop.permute.xlu0 %631
        %633 = vrot.lane.b32.xlu0 %v612, 127
        %v634 = vpop.permute.xlu0 %633
        %635 = vrot.lane.b32.xlu0 %v613, 127
        %v636 = vpop.permute.xlu0 %635
        %637 = vrot.lane.b32.xlu0 %v614, 127
        %v638 = vpop.permute.xlu0 %637
        %v647 = vmax.f32 %v607, %v624
        %v648 = vmax.f32 %v608, %v626
        %v649 = vmax.f32 %v609, %v628
        %v650 = vmax.f32 %v610, %v630
        %v651 = vmax.f32 %v611, %v632
        %v652 = vmax.f32 %v612, %v634
        %v653 = vmax.f32 %v613, %v636
        %v654 = vmax.f32 %v614, %v638
        %655 = vrot.lane.b32.xlu0 %v607, 126
        %v656 = vpop.permute.xlu0 %655
        %657 = vrot.lane.b32.xlu0 %v608, 126
        %v658 = vpop.permute.xlu0 %657
        %659 = vrot.lane.b32.xlu0 %v609, 126
        %v660 = vpop.permute.xlu0 %659
        %661 = vrot.lane.b32.xlu0 %v610, 126
        %v662 = vpop.permute.xlu0 %661
        %663 = vrot.lane.b32.xlu0 %v611, 126
        %v664 = vpop.permute.xlu0 %663
        %665 = vrot.lane.b32.xlu0 %v612, 126
        %v666 = vpop.permute.xlu0 %665
        %667 = vrot.lane.b32.xlu0 %v613, 126
        %v668 = vpop.permute.xlu0 %667
        %669 = vrot.lane.b32.xlu0 %v614, 126
        %v670 = vpop.permute.xlu0 %669
        %v679 = vmax.f32 %v647, %v656
        %v680 = vmax.f32 %v648, %v658
        %v681 = vmax.f32 %v649, %v660
        %v682 = vmax.f32 %v650, %v662
        %v683 = vmax.f32 %v651, %v664
        %v684 = vmax.f32 %v652, %v666
        %v685 = vmax.f32 %v653, %v668
        %v686 = vmax.f32 %v654, %v670
        %687 = vrot.lane.b32.xlu0 %v607, 125
        %v688 = vpop.permute.xlu0 %687
        %689 = vrot.lane.b32.xlu0 %v608, 125
        %v690 = vpop.permute.xlu0 %689
        %691 = vrot.lane.b32.xlu0 %v609, 125
        %v692 = vpop.permute.xlu0 %691
        %693 = vrot.lane.b32.xlu0 %v610, 125
        %v694 = vpop.permute.xlu0 %693
        %695 = vrot.lane.b32.xlu0 %v611, 125
        %v696 = vpop.permute.xlu0 %695
        %697 = vrot.lane.b32.xlu0 %v612, 125
        %v698 = vpop.permute.xlu0 %697
        %699 = vrot.lane.b32.xlu0 %v613, 125
        %v700 = vpop.permute.xlu0 %699
        %701 = vrot.lane.b32.xlu0 %v614, 125
        %v702 = vpop.permute.xlu0 %701
        %v711 = vmax.f32 %v679, %v688
        %v712 = vmax.f32 %v680, %v690
        %v713 = vmax.f32 %v681, %v692
        %v714 = vmax.f32 %v682, %v694
        %v715 = vmax.f32 %v683, %v696
        %v716 = vmax.f32 %v684, %v698
        %v717 = vmax.f32 %v685, %v700
        %v718 = vmax.f32 %v686, %v702
        %719 = vrot.lane.b32.xlu0 %v607, 124
        %v720 = vpop.permute.xlu0 %719
        %721 = vrot.lane.b32.xlu0 %v608, 124
        %v722 = vpop.permute.xlu0 %721
        %723 = vrot.lane.b32.xlu0 %v609, 124
        %v724 = vpop.permute.xlu0 %723
        %725 = vrot.lane.b32.xlu0 %v610, 124
        %v726 = vpop.permute.xlu0 %725
        %727 = vrot.lane.b32.xlu0 %v611, 124
        %v728 = vpop.permute.xlu0 %727
        %729 = vrot.lane.b32.xlu0 %v612, 124
        %v730 = vpop.permute.xlu0 %729
        %731 = vrot.lane.b32.xlu0 %v613, 124
        %v732 = vpop.permute.xlu0 %731
        %733 = vrot.lane.b32.xlu0 %v614, 124
        %v734 = vpop.permute.xlu0 %733
        %v743 = vmax.f32 %v711, %v720
        %v744 = vmax.f32 %v712, %v722
        %v745 = vmax.f32 %v713, %v724
        %v746 = vmax.f32 %v714, %v726
        %v747 = vmax.f32 %v715, %v728
        %v748 = vmax.f32 %v716, %v730
        %v749 = vmax.f32 %v717, %v732
        %v750 = vmax.f32 %v718, %v734
        %s751 = scalar_lea.vmem %s155, 128 [#allocation7]
        %752 = vst.msk [vmem:[%s751] sm:$0xff] %vm166, %v743
        %753 = vst.msk [vmem:[%s751 + $0x8] sm:$0xff] %vm166, %v744
        %754 = vst.msk [vmem:[%s751 + $0x10] sm:$0xff] %vm166, %v745
        %755 = vst.msk [vmem:[%s751 + $0x18] sm:$0xff] %vm166, %v746
        %756 = vst.msk [vmem:[%s751 + $0x20] sm:$0xff] %vm166, %v747
        %757 = vst.msk [vmem:[%s751 + $0x28] sm:$0xff] %vm166, %v748
        %758 = vst.msk [vmem:[%s751 + $0x30] sm:$0xff] %vm166, %v749
        %759 = vst.msk [vmem:[%s751 + $0x38] sm:$0xff] %vm166, %v750
        %768 = vrot.lane.b32.xlu0 %v743, 2
        %v769 = vpop.permute.xlu0 %768
        %770 = vrot.lane.b32.xlu0 %v744, 2
        %v771 = vpop.permute.xlu0 %770
        %772 = vrot.lane.b32.xlu0 %v745, 2
        %v773 = vpop.permute.xlu0 %772
        %774 = vrot.lane.b32.xlu0 %v746, 2
        %v775 = vpop.permute.xlu0 %774
        %776 = vrot.lane.b32.xlu0 %v747, 2
        %v777 = vpop.permute.xlu0 %776
        %778 = vrot.lane.b32.xlu0 %v748, 2
        %v779 = vpop.permute.xlu0 %778
        %780 = vrot.lane.b32.xlu0 %v749, 2
        %v781 = vpop.permute.xlu0 %780
        %782 = vrot.lane.b32.xlu0 %v750, 2
        %v783 = vpop.permute.xlu0 %782
        %792 = vst.msk [vmem:[#allocation2 + $0x2] sm:$0xff] %vm244, %v769
        %793 = vst.msk [vmem:[#allocation2 + $0xa] sm:$0xff] %vm244, %v771
        %794 = vst.msk [vmem:[#allocation2 + $0x1a] sm:$0xff] %vm244, %v773
        %795 = vst.msk [vmem:[#allocation2 + $0x22] sm:$0xff] %vm244, %v775
        %796 = vst.msk [vmem:[#allocation2 + $0x32] sm:$0xff] %vm244, %v777
        %797 = vst.msk [vmem:[#allocation2 + $0x3a] sm:$0xff] %vm244, %v779
        %798 = vst.msk [vmem:[#allocation2 + $0x4a] sm:$0xff] %vm244, %v781
        %799 = vst.msk [vmem:[#allocation2 + $0x52] sm:$0xff] %vm244, %v783
        %v800 = vld [vmem:[#allocation2] sm:$0xff]
        %v801 = vld [vmem:[#allocation2 + $0x8] sm:$0xff]
        %v802 = vld [vmem:[#allocation2 + $0x18] sm:$0xff]
        %v803 = vld [vmem:[#allocation2 + $0x20] sm:$0xff]
        %v804 = vld [vmem:[#allocation2 + $0x30] sm:$0xff]
        %v805 = vld [vmem:[#allocation2 + $0x38] sm:$0xff]
        %v806 = vld [vmem:[#allocation2 + $0x48] sm:$0xff]
        %v807 = vld [vmem:[#allocation2 + $0x50] sm:$0xff]
        %v808 = vld [vmem:[#allocation2 + $0x1] sm:$0xff]
        %v809 = vld [vmem:[#allocation2 + $0x9] sm:$0xff]
        %v810 = vld [vmem:[#allocation2 + $0x19] sm:$0xff]
        %v811 = vld [vmem:[#allocation2 + $0x21] sm:$0xff]
        %v812 = vld [vmem:[#allocation2 + $0x31] sm:$0xff]
        %v813 = vld [vmem:[#allocation2 + $0x39] sm:$0xff]
        %v814 = vld [vmem:[#allocation2 + $0x49] sm:$0xff]
        %v815 = vld [vmem:[#allocation2 + $0x51] sm:$0xff]
        %v816 = vmax.f32 %v800, %v808
        %v817 = vmax.f32 %v801, %v809
        %v818 = vmax.f32 %v802, %v810
        %v819 = vmax.f32 %v803, %v811
        %v820 = vmax.f32 %v804, %v812
        %v821 = vmax.f32 %v805, %v813
        %v822 = vmax.f32 %v806, %v814
        %v823 = vmax.f32 %v807, %v815
        %v824 = vld [vmem:[#allocation2 + $0x2] sm:$0xff]
        %v825 = vld [vmem:[#allocation2 + $0xa] sm:$0xff]
        %v826 = vld [vmem:[#allocation2 + $0x1a] sm:$0xff]
        %v827 = vld [vmem:[#allocation2 + $0x22] sm:$0xff]
        %v828 = vld [vmem:[#allocation2 + $0x32] sm:$0xff]
        %v829 = vld [vmem:[#allocation2 + $0x3a] sm:$0xff]
        %v830 = vld [vmem:[#allocation2 + $0x4a] sm:$0xff]
        %v831 = vld [vmem:[#allocation2 + $0x52] sm:$0xff]
        %v832 = vmax.f32 %v816, %v824
        %v833 = vmax.f32 %v817, %v825
        %v834 = vmax.f32 %v818, %v826
        %v835 = vmax.f32 %v819, %v827
        %v836 = vmax.f32 %v820, %v828
        %v837 = vmax.f32 %v821, %v829
        %v838 = vmax.f32 %v822, %v830
        %v839 = vmax.f32 %v823, %v831
        %v840 = vld [vmem:[#allocation2 + $0x3] sm:$0xff]
        %v841 = vld [vmem:[#allocation2 + $0xb] sm:$0xff]
        %v842 = vld [vmem:[#allocation2 + $0x1b] sm:$0xff]
        %v843 = vld [vmem:[#allocation2 + $0x23] sm:$0xff]
        %v844 = vld [vmem:[#allocation2 + $0x33] sm:$0xff]
        %v845 = vld [vmem:[#allocation2 + $0x3b] sm:$0xff]
        %v846 = vld [vmem:[#allocation2 + $0x4b] sm:$0xff]
        %v847 = vld [vmem:[#allocation2 + $0x53] sm:$0xff]
        %v848 = vmax.f32 %v832, %v840
        %v849 = vmax.f32 %v833, %v841
        %v850 = vmax.f32 %v834, %v842
        %v851 = vmax.f32 %v835, %v843
        %v852 = vmax.f32 %v836, %v844
        %v853 = vmax.f32 %v837, %v845
        %v854 = vmax.f32 %v838, %v846
        %v855 = vmax.f32 %v839, %v847
        %v856 = vld [vmem:[#allocation2 + $0x4] sm:$0xff]
        %v857 = vld [vmem:[#allocation2 + $0xc] sm:$0xff]
        %v858 = vld [vmem:[#allocation2 + $0x1c] sm:$0xff]
        %v859 = vld [vmem:[#allocation2 + $0x24] sm:$0xff]
        %v860 = vld [vmem:[#allocation2 + $0x34] sm:$0xff]
        %v861 = vld [vmem:[#allocation2 + $0x3c] sm:$0xff]
        %v862 = vld [vmem:[#allocation2 + $0x4c] sm:$0xff]
        %v863 = vld [vmem:[#allocation2 + $0x54] sm:$0xff]
        %v864 = vmax.f32 %v848, %v856
        %v865 = vmax.f32 %v849, %v857
        %v866 = vmax.f32 %v850, %v858
        %v867 = vmax.f32 %v851, %v859
        %v868 = vmax.f32 %v852, %v860
        %v869 = vmax.f32 %v853, %v861
        %v870 = vmax.f32 %v854, %v862
        %v871 = vmax.f32 %v855, %v863
        %872 = vst.msk [vmem:[#allocation3] sm:$0xff] %vm325, %v864
        %873 = vst.msk [vmem:[#allocation3 + $0x8] sm:$0xff] %vm325, %v865
        %874 = vst.msk [vmem:[#allocation3 + $0x10] sm:$0xff] %vm325, %v866
        %875 = vst.msk [vmem:[#allocation3 + $0x18] sm:$0xff] %vm325, %v867
        %876 = vst.msk [vmem:[#allocation3 + $0x20] sm:$0xff] %vm325, %v868
        %877 = vst.msk [vmem:[#allocation3 + $0x28] sm:$0xff] %vm325, %v869
        %878 = vst.msk [vmem:[#allocation3 + $0x30] sm:$0xff] %vm325, %v870
        %879 = vst.msk [vmem:[#allocation3 + $0x38] sm:$0xff] %vm325, %v871
        %v880 = vld [vmem:[#allocation3] sm:$0xff]
        %v881 = vld [vmem:[#allocation3 + $0x8] sm:$0xff]
        %v882 = vld [vmem:[#allocation3 + $0x10] sm:$0xff]
        %v883 = vld [vmem:[#allocation3 + $0x18] sm:$0xff]
        %v884 = vld [vmem:[#allocation3 + $0x20] sm:$0xff]
        %v885 = vld [vmem:[#allocation3 + $0x28] sm:$0xff]
        %v886 = vld [vmem:[#allocation3 + $0x30] sm:$0xff]
        %v887 = vld [vmem:[#allocation3 + $0x38] sm:$0xff]
        %896 = vrot.lane.b32.xlu0 %v880, 127
        %v897 = vpop.permute.xlu0 %896
        %898 = vrot.lane.b32.xlu0 %v881, 127
        %v899 = vpop.permute.xlu0 %898
        %900 = vrot.lane.b32.xlu0 %v882, 127
        %v901 = vpop.permute.xlu0 %900
        %902 = vrot.lane.b32.xlu0 %v883, 127
        %v903 = vpop.permute.xlu0 %902
        %904 = vrot.lane.b32.xlu0 %v884, 127
        %v905 = vpop.permute.xlu0 %904
        %906 = vrot.lane.b32.xlu0 %v885, 127
        %v907 = vpop.permute.xlu0 %906
        %908 = vrot.lane.b32.xlu0 %v886, 127
        %v909 = vpop.permute.xlu0 %908
        %910 = vrot.lane.b32.xlu0 %v887, 127
        %v911 = vpop.permute.xlu0 %910
        %v920 = vmax.f32 %v880, %v897
        %v921 = vmax.f32 %v881, %v899
        %v922 = vmax.f32 %v882, %v901
        %v923 = vmax.f32 %v883, %v903
        %v924 = vmax.f32 %v884, %v905
        %v925 = vmax.f32 %v885, %v907
        %v926 = vmax.f32 %v886, %v909
        %v927 = vmax.f32 %v887, %v911
        %928 = vrot.lane.b32.xlu0 %v880, 126
        %v929 = vpop.permute.xlu0 %928
        %930 = vrot.lane.b32.xlu0 %v881, 126
        %v931 = vpop.permute.xlu0 %930
        %932 = vrot.lane.b32.xlu0 %v882, 126
        %v933 = vpop.permute.xlu0 %932
        %934 = vrot.lane.b32.xlu0 %v883, 126
        %v935 = vpop.permute.xlu0 %934
        %936 = vrot.lane.b32.xlu0 %v884, 126
        %v937 = vpop.permute.xlu0 %936
        %938 = vrot.lane.b32.xlu0 %v885, 126
        %v939 = vpop.permute.xlu0 %938
        %940 = vrot.lane.b32.xlu0 %v886, 126
        %v941 = vpop.permute.xlu0 %940
        %942 = vrot.lane.b32.xlu0 %v887, 126
        %v943 = vpop.permute.xlu0 %942
        %v952 = vmax.f32 %v920, %v929
        %v953 = vmax.f32 %v921, %v931
        %v954 = vmax.f32 %v922, %v933
        %v955 = vmax.f32 %v923, %v935
        %v956 = vmax.f32 %v924, %v937
        %v957 = vmax.f32 %v925, %v939
        %v958 = vmax.f32 %v926, %v941
        %v959 = vmax.f32 %v927, %v943
        %960 = vrot.lane.b32.xlu0 %v880, 125
        %v961 = vpop.permute.xlu0 %960
        %962 = vrot.lane.b32.xlu0 %v881, 125
        %v963 = vpop.permute.xlu0 %962
        %964 = vrot.lane.b32.xlu0 %v882, 125
        %v965 = vpop.permute.xlu0 %964
        %966 = vrot.lane.b32.xlu0 %v883, 125
        %v967 = vpop.permute.xlu0 %966
        %968 = vrot.lane.b32.xlu0 %v884, 125
        %v969 = vpop.permute.xlu0 %968
        %970 = vrot.lane.b32.xlu0 %v885, 125
        %v971 = vpop.permute.xlu0 %970
        %972 = vrot.lane.b32.xlu0 %v886, 125
        %v973 = vpop.permute.xlu0 %972
        %974 = vrot.lane.b32.xlu0 %v887, 125
        %v975 = vpop.permute.xlu0 %974
        %v984 = vmax.f32 %v952, %v961
        %v985 = vmax.f32 %v953, %v963
        %v986 = vmax.f32 %v954, %v965
        %v987 = vmax.f32 %v955, %v967
        %v988 = vmax.f32 %v956, %v969
        %v989 = vmax.f32 %v957, %v971
        %v990 = vmax.f32 %v958, %v973
        %v991 = vmax.f32 %v959, %v975
        %992 = vrot.lane.b32.xlu0 %v880, 124
        %v993 = vpop.permute.xlu0 %992
        %994 = vrot.lane.b32.xlu0 %v881, 124
        %v995 = vpop.permute.xlu0 %994
        %996 = vrot.lane.b32.xlu0 %v882, 124
        %v997 = vpop.permute.xlu0 %996
        %998 = vrot.lane.b32.xlu0 %v883, 124
        %v999 = vpop.permute.xlu0 %998
        %1000 = vrot.lane.b32.xlu0 %v884, 124
        %v1001 = vpop.permute.xlu0 %1000
        %1002 = vrot.lane.b32.xlu0 %v885, 124
        %v1003 = vpop.permute.xlu0 %1002
        %1004 = vrot.lane.b32.xlu0 %v886, 124
        %v1005 = vpop.permute.xlu0 %1004
        %1006 = vrot.lane.b32.xlu0 %v887, 124
        %v1007 = vpop.permute.xlu0 %1006
        %v1016 = vmax.f32 %v984, %v993
        %v1017 = vmax.f32 %v985, %v995
        %v1018 = vmax.f32 %v986, %v997
        %v1019 = vmax.f32 %v987, %v999
        %v1020 = vmax.f32 %v988, %v1001
        %v1021 = vmax.f32 %v989, %v1003
        %v1022 = vmax.f32 %v990, %v1005
        %v1023 = vmax.f32 %v991, %v1007
        %s1024 = scalar_lea.vmem %s155, 192 [#allocation7]
        %1025 = vst.msk [vmem:[%s1024] sm:$0xff] %vm166, %v1016
        %1026 = vst.msk [vmem:[%s1024 + $0x8] sm:$0xff] %vm166, %v1017
        %1027 = vst.msk [vmem:[%s1024 + $0x10] sm:$0xff] %vm166, %v1018
        %1028 = vst.msk [vmem:[%s1024 + $0x18] sm:$0xff] %vm166, %v1019
        %1029 = vst.msk [vmem:[%s1024 + $0x20] sm:$0xff] %vm166, %v1020
        %1030 = vst.msk [vmem:[%s1024 + $0x28] sm:$0xff] %vm166, %v1021
        %1031 = vst.msk [vmem:[%s1024 + $0x30] sm:$0xff] %vm166, %v1022
        %1032 = vst.msk [vmem:[%s1024 + $0x38] sm:$0xff] %vm166, %v1023
        %s1033 = sand.u32 %s68, 1
        %s1034 = scalar_lea.sflag [#allocation6], %s1033
        %s1035 = sand.u32 %s68, 1
        %s1036 = smul.addr %s1035, 256
        %s1037 = scalar_lea.vmem [#allocation7], %s1036
        // Predicated region
        $region29: #{spp_layer.1} parent=23 // pred_check
          %p1038 = pneg %p78
        $region30: #{spp_layer.1} parent=23 // pred_check_branch
          %1040 = sbr.rel (%p1038) target = $region32
        $region31: #{spp_layer.1} parent=23 // pred_region
          %s1041 = smul.u32 4, %s23
          %1043 = vsyncadd %s1034, 0
          %s1044 = smul.addr %s1041, 2
          %s1045 = smul.addr %s22, 32
          %s1046 = sadd.s32 %s1044, %s1045
          %s1047 = smul.addr %s1046, 8
          %s1048 = scalar_lea.hbm %s1, %s1047
          %s1049 = sshll.u32 %s1037, 4
          %s1050 = int_to_ptr.vmem [resolvable:$true] %s1049
          %s1051 = sshll.u32 %s1048, 4
          %s1052 = int_to_ptr.hbm [resolvable:$true] %s1051
          %1057 = dma.vmem_to_hbm [thread:$0]  %s1050, 4096, %s1052, %s1034, 128, 128, 8
        $region32: #{spp_layer.1} parent=23 // pred_fallthru
          _
      $region24: #{spp_layer.1} parent=5 // pred_fallthru
        _
      %p1058 = scmp.le.s32.totalorder 2, %s13
      // Predicated region
      $region33: #{spp_layer.1} parent=5 // pred_check
        %p1059 = pneg %p1058
      $region34: #{spp_layer.1} parent=5 // pred_check_branch
        %1061 = sbr.rel (%p1059) target = $region36
      $region35: #{spp_layer.1} parent=5 // pred_region
        %s1062 = ssub.s32 %s13, 2
        // Predicated region
        $region37: #{spp_layer.1} parent=35 // pred_check
          %p1063 = pneg %p84
        $region38: #{spp_layer.1} parent=35 // pred_check_branch
          %1065 = sbr.rel (%p1063) target = $region40
        $region39: #{spp_layer.1} parent=35 // pred_region
          %s1066 = sand.u32 %s69, 1
          %s1067 = scalar_lea.sflag [#allocation6], %s1066
          %s1068 = sand.u32 %s69, 1
          %s1069 = smul.addr %s1068, 256
          %s1070 = scalar_lea.vmem [#allocation7], %s1069
          %1072 = dma.done %s1067, 4096
        $region40: #{spp_layer.1} parent=35 // pred_fallthru
          _
      $region36: #{spp_layer.1} parent=5 // pred_fallthru
        _
    $region6: #{spp_layer.1} parent=1 // loop_footer
      %s17 = sadd.s32 1, %s13
    $region7: #{spp_layer.1} parent=1 // loop_footer_branch
      %12 = sbr.rel target = $region3
    $region8: #{spp_layer.1} parent=1 // loop_exit
      _
    %1073 = vsyncpa [#allocation5], 1
    %s1074 = scalar_lea.sflag [#allocation5], 1
    %1075 = vsyncpa %s1074, 1
    %1076 = vsyncpa [#allocation6], 1
    %s1077 = scalar_lea.sflag [#allocation6], 1
    %1078 = vsyncpa %s1077, 1

</llo_original>
